<compile_context>
chip_gen: v5e
topology: v5e:2x2
jax: 0.10.0
libtpu: 0.0.40
codegen_flags: <defaults>
</compile_context>

<pallas_src>
import functools
import math

import jax
import jax.numpy as jnp
from jax.experimental import pallas as pl
from jax.experimental.pallas import tpu as pltpu


def _concat_attention_kernel(v_ref, qh_ref, w1v_ref, w2_ref, out_ref, *,
                             approx_recip=True):
    # v_ref:   (TB*N, Dv) f32  -- streamed as f32, cast to bf16 here for the MXU
    # qh_ref:  (TB, H)    f32  -- precomputed q @ W1q + b1
    # w1v_ref: (Dv, H)    bf16 -- visual half of weight-normed W1 (resident)
    # w2_ref:  (1, H)     f32  -- second-layer weight row (resident)
    # out_ref: (TB, N)    f32  -- softmax over num_objs per batch row
    tb, n = out_ref.shape
    h_dim = w1v_ref.shape[1]

    # First linear on the MXU: cast the DMA'd f32 block to bf16 in-register
    # (HBM sees exactly one 4 B/elem pass over v), accumulate in f32.
    h = jnp.dot(v_ref[...].astype(jnp.bfloat16), w1v_ref[...],
                preferred_element_type=jnp.float32)              # (TB*N, H)

    # Add the hoisted query projection (already contains b1) per batch row;
    # ReLU.  Leading-dim split only: lane dim H untouched -> no relayout.
    h = h.reshape(tb, n, h_dim) + qh_ref[...][:, None, :]        # (TB, N, H)
    h = jnp.maximum(h, 0.0)

    # Second linear (H -> 1): VPU multiply + XLU lane reduction (keeps the MXU
    # free; a lane-1 MXU result would have a bad layout).  b2 omitted: a
    # per-row constant shift cancels exactly in the softmax below.
    logits = jnp.sum(h * w2_ref[...], axis=-1)                   # (TB, N)

    # Softmax over num_objs per batch row, all in f32.
    m = jnp.max(logits, axis=-1, keepdims=True)
    e = jnp.exp(logits - m)
    s = jnp.sum(e, axis=-1, keepdims=True)
    if approx_recip:
        # EUP vrcp (free slot); rows sum to 1 only to ~1e-3 -> gated by flag.
        out_ref[...] = e * pl.reciprocal(s, approx=True)
    else:
        out_ref[...] = e / s


def _resident_spec(shape):
    """BlockSpec for a block whose index never changes across the grid.

    Single-buffer it (pipeline_mode=pl.Buffered(1)) when it is large enough
    that default double-buffering would waste meaningful VMEM (matters on
    v7x's 64 MiB); tiny slabs keep the plain, always-supported spec."""
    idx = lambda b: (0,) * len(shape)
    if 4 * math.prod(shape) >= (1 << 20):
        try:
            return pl.BlockSpec(shape, idx, pipeline_mode=pl.Buffered(1))
        except (TypeError, AttributeError):
            pass  # older/newer Pallas without pipeline_mode: fall through
    return pl.BlockSpec(shape, idx)


def _pick_tb(B, N, Dv, H, *, vmem_budget_bytes=20 << 20):
    """Batch rows per grid step.

    Sized so the per-step working set (double-buffered f32 v block, in-kernel
    bf16 copy, f32 `h` intermediate + epilogue temps, qh/out buffers) fits the
    VMEM budget, the MXU M dimension (tb*N) aligns to 256, and large B keeps
    >= 2 grid steps so both v7x TensorCores get work."""
    per_b = N * (10 * Dv + 12 * H + 8) + 8 * H      # ~bytes of working set / row
    cap = max(1, vmem_budget_bytes // per_b)
    tb = min(B, cap)
    if tb == B and B >= 16:
        tb = pl.cdiv(B, 2)          # force >= 2 grid steps (v7x: 2 TCs)
    if tb != B:
        # Block-shape rule: second-minor dims (tb and tb*N) must be multiples
        # of 8 unless they span the full array (tb == B handles the tiny case).
        tb = max(8, (tb // 8) * 8)
        # Align tb*N to 256 (v6e/v7x MXU width; also a multiple of v5e's 128)
        # once the tile is large enough to afford it.
        a = 256 // math.gcd(N, 256)
        if tb >= a:
            tb = (tb // a) * a
    return tb


def concat_attention(v, q, w1v, w1q, b1, w2row, b2=None, *, tb=None,
                     approx_recip=True):
    """v: [B, N, Dv] f32, q: [B, Dq] f32 -> [B, N, 1] f32 (softmax over N)."""
    B, N, Dv = v.shape
    H = w1v.shape[1]
    if tb is None:
        tb = _pick_tb(B, N, Dv, H)
    tb = max(1, min(tb, B))
    grid = pl.cdiv(B, tb)

    # Hoist the query projection: one [B,Dq]@[Dq,H] matmul (b1 folds in here)
    # instead of skinny per-step MXU passes.  b2 cancels in the softmax.
    qh = jnp.dot(q, w1q, preferred_element_type=jnp.float32) + b1      # (B, H)

    # v stays f32 and is only reshaped (free for a contiguous array); the bf16
    # cast for the MXU happens inside the kernel.  No padding of v: the ragged
    # last block is masked by Pallas.
    v2 = v.reshape(B * N, Dv)
    w1v_bf = w1v.astype(jnp.bfloat16)       # tiny resident weight slab
    w2row = w2row.astype(jnp.float32)

    # Per-step VMEM footprint -> explicit scoped-VMEM limit (v5e default is
    # only 16 MiB; stay well under v7x's 64 MiB physical).
    est = (2 * tb * N * Dv * 4        # double-buffered f32 v blocks
           + tb * N * Dv * 2          # in-kernel bf16 copy fed to the MXU
           + 3 * tb * N * H * 4       # f32 h + ReLU/broadcast temporaries
           + 2 * tb * H * 4           # qh double buffer
           + 2 * tb * N * 4           # out double buffer
           + Dv * H * 2 + H * 4)      # resident weights
    vmem_limit = int(min(48 << 20, max(32 << 20, est * 5 // 4)))

    grid_spec = pltpu.PrefetchScalarGridSpec(
        num_scalar_prefetch=0,
        grid=(grid,),
        in_specs=[
            pl.BlockSpec((tb * N, Dv), lambda b: (b, 0)),   # v rows, tb batches
            pl.BlockSpec((tb, H),      lambda b: (b, 0)),   # hoisted q-projection
            _resident_spec((Dv, H)),                        # visual W1 slab
            _resident_spec((1, H)),                         # second-layer row
        ],
        # (tb, N) output block: last dim spans the full array (always legal);
        # a flat (1, tb*N) lane-dense slab would need an unsupported
        # sublane->lane relayout and the output is a negligible byte stream.
        out_specs=pl.BlockSpec((tb, N), lambda b: (b, 0)),
    )

    out = pl.pallas_call(
        functools.partial(_concat_attention_kernel, approx_recip=approx_recip),
        out_shape=jax.ShapeDtypeStruct((B, N), jnp.float32),
        grid_spec=grid_spec,
        compiler_params=pltpu.CompilerParams(
            dimension_semantics=("parallel",),   # batch steps shard across TCs
            vmem_limit_bytes=vmem_limit),
    )(v2, qh, w1v_bf, w2row)

    # Restore the module's [B, N, 1] output shape (nothing was padded).
    return out[:, :, None]


def _weight_norm_effective(v_weight, g_scalar):
    # PyTorch weight_norm with dim=None: W = g * V / ||V||_F  (g is a scalar).
    norm = jnp.sqrt(jnp.sum(v_weight * v_weight))
    return (g_scalar / norm) * v_weight


def make_params(key, v_dim, q_dim, hidden_dim):
    """Deterministic synthetic parameters mirroring the nn.Linear shapes."""
    k1, k2, k3, k4, k5, k6 = jax.random.split(key, 6)
    in_dim = v_dim + q_dim

    # Linear 1: weight [hidden, in_dim], bias [hidden]  (weight-normed, dim=None)
    lim1 = 1.0 / jnp.sqrt(in_dim)
    v1 = jax.random.uniform(k1, (hidden_dim, in_dim), jnp.float32, -lim1, lim1)
    g1 = jax.random.uniform(k2, (), jnp.float32, 0.5, 1.5)
    b1 = jax.random.uniform(k3, (hidden_dim,), jnp.float32, -lim1, lim1)
    w1 = _weight_norm_effective(v1, g1)                        # [H, Dv+Dq]

    # Linear 2: weight [1, hidden], bias [1]  (weight-normed, dim=None)
    lim2 = 1.0 / jnp.sqrt(hidden_dim)
    v2 = jax.random.uniform(k4, (1, hidden_dim), jnp.float32, -lim2, lim2)
    g2 = jax.random.uniform(k5, (), jnp.float32, 0.5, 1.5)
    b2 = jax.random.uniform(k6, (1,), jnp.float32, -lim2, lim2)
    w2 = _weight_norm_effective(v2, g2)                        # [1, H]

    # Pre-split / pre-transpose for the kernel.
    w1v = jnp.transpose(w1[:, :v_dim])          # [Dv, H]
    w1q = jnp.transpose(w1[:, v_dim:])          # [Dq, H]
    b1k = b1.reshape(1, hidden_dim)             # [1, H]
    w2k = w2                                    # [1, H] (row form)
    b2k = b2.reshape(1, 1)                      # [1, 1]
    return w1v, w1q, b1k, w2k, b2k


def _reference(v, q, w1v, w1q, b1, w2row, b2):
    # Plain-JAX f32 reference of the same math (includes b2; softmax cancels it).
    h = jnp.maximum(
        jnp.einsum("bnd,dh->bnh", v, w1v)
        + jnp.einsum("bd,dh->bh", q, w1q)[:, None, :]
        + b1, 0.0)
    logits = jnp.einsum("bnh,oh->bno", h, w2row) + b2
    return jax.nn.softmax(logits, axis=1)


if __name__ == "__main__":
    V_DIM, Q_DIM, HIDDEN = 16, 16, 32

    key = jax.random.PRNGKey(0)
    kp, kdata = jax.random.split(key)
    params = make_params(kp, V_DIM, Q_DIM, HIDDEN)

    # (B=2,  tb auto):  whole batch in one full-extent block / single grid step.
    # (B=10, tb auto):  single step, no padding anywhere.
    # (B=10, tb=8):     multi-step grid with a ragged (masked) last block.
    # (B=34, tb auto):  exercises the >=2-step auto split (tb=16, 3 steps, tail).
    for B, N, kw in [(2, 8, {}), (10, 8, {}), (10, 8, dict(tb=8)), (34, 8, {})]:
        kv, kq, kdata = jax.random.split(kdata, 3)
        v = jax.random.normal(kv, (B, N, V_DIM), jnp.float32)
        q = jax.random.normal(kq, (B, Q_DIM), jnp.float32)

        out = jax.block_until_ready(concat_attention(v, q, *params, **kw))
        ref = _reference(v, q, *params)

        assert out.shape == (B, N, 1)
        # bf16 MXU inputs (f32 accumulation) vs f32 reference -> loose tolerance.
        assert jnp.allclose(out, ref, atol=2e-2, rtol=2e-2)
        # softmax over num_objs sums to ~1 per batch row (approx reciprocal).
        assert jnp.allclose(jnp.sum(out, axis=1), 1.0, atol=1e-2)

    print("KERNEL_OK")
</pallas_src>

<mosaic_0001>
module attributes {stable_mosaic.version = 11 : i64} {
  func.func @_concat_attention_kernel(%arg0: i32, %arg1: memref<16x16xf32, #tpu.memory_space<vmem>>, %arg2: memref<2x32xf32, #tpu.memory_space<vmem>>, %arg3: memref<16x32xbf16, #tpu.memory_space<vmem>>, %arg4: memref<1x32xf32, #tpu.memory_space<vmem>>, %arg5: memref<2x8xf32, #tpu.memory_space<vmem>>) attributes {dimension_semantics = [#tpu.dimension_semantics<parallel>], iteration_bounds = array<i64: 1>, scalar_prefetch = 0 : i64, scratch_operands = 0 : i64, tpu.core_type = #tpu.core_type<tc>, window_params = [{transform_indices = @transform_0, window_bounds = array<i64: 16, 16>}, {transform_indices = @transform_1, window_bounds = array<i64: 2, 32>}, {pipeline_mode = #tpu.pipeline_mode<synchronous>, transform_indices = @transform_2, window_bounds = array<i64: 16, 32>}, {pipeline_mode = #tpu.pipeline_mode<synchronous>, transform_indices = @transform_3, window_bounds = array<i64: 1, 32>}, {transform_indices = @transform_4, window_bounds = array<i64: 2, 8>}]} {
    %c0 = arith.constant 0 : index
    %c0_0 = arith.constant 0 : index
    %0 = vector.load %arg1[%c0, %c0_0] : memref<16x16xf32, #tpu.memory_space<vmem>>, vector<16x16xf32>
    %1 = arith.truncf %0 : vector<16x16xf32> to vector<16x16xbf16>
    %c0_1 = arith.constant 0 : index
    %c0_2 = arith.constant 0 : index
    %2 = vector.load %arg3[%c0_1, %c0_2] : memref<16x32xbf16, #tpu.memory_space<vmem>>, vector<16x32xbf16>
    %cst = arith.constant dense<0.000000e+00> : vector<16x32xf32>
    %3 = tpu.matmul %1, %2, %cst {dimension_numbers = #tpu.dot_dimension_numbers<[1], [0], [0], [1], [0, 0, 1, 1], [], []>} : vector<16x16xbf16>, vector<16x32xbf16>, vector<16x32xf32> -> vector<16x32xf32>
    %4 = vector.shape_cast %3 : vector<16x32xf32> to vector<2x8x32xf32>
    %c0_3 = arith.constant 0 : index
    %c0_4 = arith.constant 0 : index
    %5 = vector.load %arg2[%c0_3, %c0_4] : memref<2x32xf32, #tpu.memory_space<vmem>>, vector<2x32xf32>
    %6 = vector.shape_cast %5 : vector<2x32xf32> to vector<2x1x32xf32>
    %7 = vector.broadcast %6 : vector<2x1x32xf32> to vector<2x8x32xf32>
    %8 = arith.addf %4, %7 : vector<2x8x32xf32>
    %cst_5 = arith.constant 0.000000e+00 : f32
    %9 = vector.broadcast %cst_5 : f32 to vector<2x8x32xf32>
    %10 = arith.maximumf %8, %9 : vector<2x8x32xf32>
    %c0_6 = arith.constant 0 : index
    %c0_7 = arith.constant 0 : index
    %11 = vector.load %arg4[%c0_6, %c0_7] : memref<1x32xf32, #tpu.memory_space<vmem>>, vector<1x32xf32>
    %12 = vector.shape_cast %11 : vector<1x32xf32> to vector<1x1x32xf32>
    %13 = vector.broadcast %12 : vector<1x1x32xf32> to vector<2x8x32xf32>
    %14 = arith.mulf %10, %13 : vector<2x8x32xf32>
    %cst_8 = arith.constant dense<0.000000e+00> : vector<2x8xf32>
    %15 = vector.multi_reduction <add>, %14, %cst_8 [2] : vector<2x8x32xf32> to vector<2x8xf32>
    %cst_9 = arith.constant dense<0xFF800000> : vector<2xf32>
    %16 = vector.multi_reduction <maximumf>, %15, %cst_9 [1] : vector<2x8xf32> to vector<2xf32>
    %17 = vector.shape_cast %16 : vector<2xf32> to vector<2x1xf32>
    %18 = vector.broadcast %17 : vector<2x1xf32> to vector<2x8xf32>
    %19 = arith.subf %15, %18 : vector<2x8xf32>
    %20 = math.exp %19 : vector<2x8xf32>
    %cst_10 = arith.constant dense<0.000000e+00> : vector<2xf32>
    %21 = vector.multi_reduction <add>, %20, %cst_10 [1] : vector<2x8xf32> to vector<2xf32>
    %22 = vector.shape_cast %21 : vector<2xf32> to vector<2x1xf32>
    %23 = tpu.reciprocal %22 {approx = true} : vector<2x1xf32> -> vector<2x1xf32>
    %24 = vector.broadcast %23 : vector<2x1xf32> to vector<2x8xf32>
    %25 = arith.mulf %20, %24 : vector<2x8xf32>
    %c0_11 = arith.constant 0 : index
    %c0_12 = arith.constant 0 : index
    %26 = vector.load %arg5[%c0_11, %c0_12] : memref<2x8xf32, #tpu.memory_space<vmem>>, vector<2x8xf32>
    tpu.vector_store %arg5[%c0_11, %c0_12], %25 {strides = array<i32>} : memref<2x8xf32, #tpu.memory_space<vmem>>, vector<2x8xf32>,
    return
  }
  func.func @transform_0(%arg0: i32) -> (i32, i32) {
    %c0_i32 = arith.constant 0 : i32
    %c0_i32_0 = arith.constant 0 : i32
    return %arg0, %c0_i32 : i32, i32
  }
  func.func @transform_1(%arg0: i32) -> (i32, i32) {
    %c0_i32 = arith.constant 0 : i32
    %c0_i32_0 = arith.constant 0 : i32
    return %arg0, %c0_i32 : i32, i32
  }
  func.func @transform_2(%arg0: i32) -> (i32, i32) {
    %c0_i32 = arith.constant 0 : i32
    %c0_i32_0 = arith.constant 0 : i32
    %c0_i32_1 = arith.constant 0 : i32
    return %c0_i32, %c0_i32_0 : i32, i32
  }
  func.func @transform_3(%arg0: i32) -> (i32, i32) {
    %c0_i32 = arith.constant 0 : i32
    %c0_i32_0 = arith.constant 0 : i32
    %c0_i32_1 = arith.constant 0 : i32
    return %c0_i32, %c0_i32_0 : i32, i32
  }
  func.func @transform_4(%arg0: i32) -> (i32, i32) {
    %c0_i32 = arith.constant 0 : i32
    %c0_i32_0 = arith.constant 0 : i32
    return %arg0, %c0_i32 : i32, i32
  }
}

</mosaic_0001>

<llo_original>
// kernel: tpu_custom_call.1
$region0: #{tpu_custom_call.1}
  #allocation0 [shape = 'u32[]', space=smem, size = 0x4, offset = 0x4, fixed_abs, tag = 'smem constant byte address 0x4 - core index']
  #allocation1 [shape = 'u32[72,128]{1,0:T(1,128)}', space=vmem, size = 0x9000, scoped, tag = 'internal scratch']
  %s0 = inlined_call_operand.hbm [shape: f32[16,16], index: 0, kind: input, shape index: {}]
  %s1 = inlined_call_operand.hbm [shape: f32[2,32], index: 1, kind: input, shape index: {}]
  %s2 = inlined_call_operand.hbm [shape: bf16[16,32], index: 2, kind: input, shape index: {}]
  %s3 = inlined_call_operand.vmem [shape: f32[1,32], index: 3, kind: input, shape index: {}]
  %s4 = inlined_call_operand.hbm [shape: f32[2,8], index: 4, kind: output, shape index: {}]
  %s5 = sld [smem:[#allocation0]]
  $region38: #{tpu_custom_call.1} parent=0
    _
  %s7 = ssub.s32 1, %s5
  %s8 = scalar_select 0, %s7, %s5
  $region1: #{tpu_custom_call.1} parent=0
    #allocation2 [shape = 'u8[8192]{0}', space=vmem, size = 0x2000, scoped, tag = 'input window, operand 0, single buffered']
    #allocation3 [shape = 's32[1]{0}', space=sflag, size = 0x4, scoped, tag = 'scoped memory for tpu_custom_call.1']
    #allocation4 [shape = 's32[1]{0}', space=sflag, size = 0x4, scoped, tag = 'scoped memory for tpu_custom_call.1']
    #allocation5 [shape = 'u8[1024]{0}', space=vmem, size = 0x400, scoped, tag = 'input window, operand 1, single buffered']
    #allocation6 [shape = 's32[1]{0}', space=sflag, size = 0x4, scoped, tag = 'scoped memory for tpu_custom_call.1']
    #allocation7 [shape = 'u8[4096]{0}', space=vmem, size = 0x1000, scoped, tag = 'input window, operand 2, single buffered']
    #allocation8 [shape = 'u8[1024]{0}', space=vmem, size = 0x400, scoped, tag = 'output window, operand 0, single buffered']
    %9 = vsyncpa [#allocation3], 0
    %10 = vsyncpa [#allocation6], 0
    %11 = vsyncpa [#allocation4], 0
    // Predicated region
    $region2: #{tpu_custom_call.1} parent=1 // pred_check
      _
    $region3: #{tpu_custom_call.1} parent=1 // pred_check_branch
      %13 = sbr.rel (0) target = $region5
    $region4: #{tpu_custom_call.1} parent=1 // pred_region
      %15 = vsyncadd [#allocation3], 0
      %s16 = sshll.u32 %s0, 4
      %s17 = int_to_ptr.hbm [resolvable:$true] %s16
      %s18 = sshll.u32 [#allocation2], 4
      %s19 = int_to_ptr.vmem [resolvable:$true] %s18
      %24 = dma.hbm_to_vmem [thread:$0]  %s17, 256, %s19, [#allocation3], 128, 128, 8
    $region5: #{tpu_custom_call.1} parent=1 // pred_fallthru
      _
    // Predicated region
    $region6: #{tpu_custom_call.1} parent=1 // pred_check
      _
    $region7: #{tpu_custom_call.1} parent=1 // pred_check_branch
      %26 = sbr.rel (0) target = $region9
    $region8: #{tpu_custom_call.1} parent=1 // pred_region
      %28 = vsyncadd [#allocation6], 0
      %s30 = sshll.u32 %s1, 4
      %s31 = int_to_ptr.hbm [resolvable:$true] %s30
      %s32 = sshll.u32 [#allocation5], 4
      %s33 = int_to_ptr.vmem [resolvable:$true] %s32
      %35 = dma.hbm_to_vmem [thread:$0]  %s31, 32, %s33, [#allocation6]
    $region9: #{tpu_custom_call.1} parent=1 // pred_fallthru
      _
    // Predicated region
    $region10: #{tpu_custom_call.1} parent=1 // pred_check
      _
    $region11: #{tpu_custom_call.1} parent=1 // pred_check_branch
      %37 = sbr.rel (0) target = $region13
    $region12: #{tpu_custom_call.1} parent=1 // pred_region
      %39 = vsyncadd [#allocation6], 0
      %s40 = sshll.u32 %s2, 4
      %s41 = int_to_ptr.hbm [resolvable:$true] %s40
      %s42 = sshll.u32 [#allocation7], 4
      %s43 = int_to_ptr.vmem [resolvable:$true] %s42
      %48 = dma.hbm_to_vmem [thread:$0]  %s41, 128, %s43, [#allocation6], 64, 64, 4
    $region13: #{tpu_custom_call.1} parent=1 // pred_fallthru
      _
    // Predicated region
    $region14: #{tpu_custom_call.1} parent=1 // pred_check
      _
    $region15: #{tpu_custom_call.1} parent=1 // pred_check_branch
      %50 = sbr.rel (0) target = $region17
    $region16: #{tpu_custom_call.1} parent=1 // pred_region
      _
    $region17: #{tpu_custom_call.1} parent=1 // pred_fallthru
      _
    // Predicated region
    $region18: #{tpu_custom_call.1} parent=1 // pred_check
      _
    $region19: #{tpu_custom_call.1} parent=1 // pred_check_branch
      %52 = sbr.rel (0) target = $region21
    $region20: #{tpu_custom_call.1} parent=1 // pred_region
      %54 = dma.done [#allocation3], 256
    $region21: #{tpu_custom_call.1} parent=1 // pred_fallthru
      _
    // Predicated region
    $region22: #{tpu_custom_call.1} parent=1 // pred_check
      _
    $region23: #{tpu_custom_call.1} parent=1 // pred_check_branch
      %56 = sbr.rel (0) target = $region25
    $region24: #{tpu_custom_call.1} parent=1 // pred_region
      %58 = dma.done [#allocation6], 32
    $region25: #{tpu_custom_call.1} parent=1 // pred_fallthru
      _
    // Predicated region
    $region26: #{tpu_custom_call.1} parent=1 // pred_check
      _
    $region27: #{tpu_custom_call.1} parent=1 // pred_check_branch
      %60 = sbr.rel (0) target = $region29
    $region28: #{tpu_custom_call.1} parent=1 // pred_region
      %62 = dma.done [#allocation6], 128
    $region29: #{tpu_custom_call.1} parent=1 // pred_fallthru
      _
    %v64 = vld [vmem:[#allocation2] sm:$0xff]
    %v65 = vld [vmem:[#allocation2 + $0x8] sm:$0xff]
    %v66 = vpack.c.bf16 %v65, %v64
    %v67 = vld [vmem:[#allocation7] sm:$0xf]
    %v68 = vld [vmem:[#allocation7 + $0x4] sm:$0xf]
    %v71 = vunpack.c.l.b16 %v67
    %v72 = vunpack.c.l.b16 %v68
    %v73 = vpack.c.b16 %v72, %v71
    %vm75 = vcmask 130048
    %v77 = vsel %vm75, %v66, 0
    %79 = vmatpush.bf16.msra.mxu0 0
    %80 = vmatpush.bf16.msra.mxu0 0
    %81 = vmatpush.bf16.msra.mxu0 0
    %82 = vmatpush.bf16.msra.mxu0 0
    %83 = vmatpush.bf16.msra.mxu0 0
    %84 = vmatpush.bf16.msra.mxu0 0
    %85 = vmatpush.bf16.msra.mxu0 0
    %86 = vmatpush.bf16.msra.mxu0 %v73
    %87 = vmatmul.bf16.gmra.mxu0 %v77
    %v88 = vpop.f32.mrf.mxu0
    %v89 = vadd.f32 0.0, %v88
    %v90 = vpop.f32.mrf.mxu0
    %v91 = vadd.f32 0.0, %v90
    %92 = vdwg.mxu0
    %v93 = vld [vmem:[#allocation5] sm:$0x3]
    %v95 = vrot.slane %v93, 1
    %v96 = vperm.slane %v93, 0
    %v97 = vperm.slane %v95, 0
    %v100 = vadd.f32 %v89, %v96
    %v101 = vadd.f32 %v91, %v97
    %v102 = vmax.f32 %v100, 0.0
    %v103 = vmax.f32 %v101, 0.0
    %v104 = vld [vmem:[%s3] sm:$0x1]
    %v106 = vperm.slane %v104, 0
    %v108 = vmul.f32 %v102, %v106
    %v109 = vmul.f32 %v103, %v106
    %vm110 = vcmask 261120
    %v111 = vsel %vm110, %v108, 0.0
    %112 = vadd.xlane.f32.xlu0 %v111
    %v113 = vpop.xlane.xlu0 %112
    %v114 = vsel %vm110, %v109, 0.0
    %115 = vadd.xlane.f32.xlu0 %v114
    %v116 = vpop.xlane.xlu0 %115
    %v119 = vlaneseq
    %v120 = vand.u32 %v119, 127
    %v121 = vperm.slane %v113, %v120
    %v122 = vperm.slane %v116, %v120
    %vm123 = vcmask 1041409
    %v124 = vsel %vm123, %v122, %v121
    %vm126 = vcmask 58368
    %v127 = vsel %vm126, %v124, -inf
    %128 = vmax.xlane.f32.xlu0 %v127
    %v129 = vpop.xlane.xlu0 %128
    %v131 = vperm.slane %v129, 0
    %v132 = vperm.slane %v129, 1
    %v135 = vsub.f32 %v113, %v131
    %v136 = vsub.f32 %v116, %v132
    %v137 = vmul.f32 %v135, 1.442695
    %v138 = vpow.pop %v137
    %v139 = vmul.f32 %v136, 1.442695
    %v140 = vpow.pop %v139
    %143 = vset.pattern.permute.xlu0 0
    %144 = vperm.xlu0 %143, %v138
    %v145 = vpop.permute.xlu0 %144
    %146 = vset.pattern.permute.xlu0 0
    %147 = vperm.xlu0 %146, %v140
    %v148 = vpop.permute.xlu0 %147
    %v149 = vperm.slane %v145, %v120
    %v150 = vperm.slane %v148, %v120
    %v151 = vsel %vm123, %v150, %v149
    %v153 = vsel %vm126, %v151, 0.0
    %154 = vadd.xlane.f32.xlu0 %v153
    %v155 = vpop.xlane.xlu0 %154
    %v156 = vrcp.pop %v155
    %v158 = vperm.slane %v156, 0
    %v159 = vperm.slane %v156, 1
    %v162 = vmul.f32 %v138, %v158
    %v163 = vmul.f32 %v140, %v159
    %166 = vset.pattern.permute.xlu0 0
    %167 = vperm.xlu0 %166, %v162
    %v168 = vpop.permute.xlu0 %167
    %169 = vset.pattern.permute.xlu0 0
    %170 = vperm.xlu0 %169, %v163
    %v171 = vpop.permute.xlu0 %170
    %v172 = vperm.slane %v168, %v120
    %v173 = vperm.slane %v171, %v120
    %v174 = vsel %vm123, %v173, %v172
    %176 = vst.msk [vmem:[#allocation8] sm:$0x3] %vm126, %v174
    // Predicated region
    $region30: #{tpu_custom_call.1} parent=1 // pred_check
      _
    $region31: #{tpu_custom_call.1} parent=1 // pred_check_branch
      %178 = sbr.rel (0) target = $region33
    $region32: #{tpu_custom_call.1} parent=1 // pred_region
      %180 = vsyncadd [#allocation4], 0
      %s182 = sshll.u32 [#allocation8], 4
      %s183 = int_to_ptr.vmem [resolvable:$true] %s182
      %s184 = sshll.u32 %s4, 4
      %s185 = int_to_ptr.hbm [resolvable:$true] %s184
      %187 = dma.vmem_to_hbm [thread:$0]  %s183, 32, %s185, [#allocation4]
    $region33: #{tpu_custom_call.1} parent=1 // pred_fallthru
      _
    // Predicated region
    $region34: #{tpu_custom_call.1} parent=1 // pred_check
      _
    $region35: #{tpu_custom_call.1} parent=1 // pred_check_branch
      %189 = sbr.rel (0) target = $region37
    $region36: #{tpu_custom_call.1} parent=1 // pred_region
      %191 = dma.done [#allocation4], 32
    $region37: #{tpu_custom_call.1} parent=1 // pred_fallthru
      _
    %192 = vsyncpa [#allocation3], 1
    %193 = vsyncpa [#allocation6], 1
    %194 = vsyncpa [#allocation4], 1

</llo_original>
